<compile_context>
chip_gen: v7x
topology: tpu7x:2x2x1
jax: 0.10.0
libtpu: 0.0.40
codegen_flags: <defaults>
</compile_context>

<pallas_src>
import functools

import jax
import jax.numpy as jnp
from jax.experimental import pallas as pl
from jax.experimental.pallas import tpu as pltpu


def actor_kernel(x_ref, w1_ref, b1_ref, w2_ref, b2_ref, w3_ref, b3_ref, o_ref,
                 *, action_scale, action_bias):
    x = x_ref[...]

    # fc1 + ReLU
    h1 = jnp.dot(x, w1_ref[...], preferred_element_type=jnp.float32) + b1_ref[...]
    h1 = jnp.maximum(h1, 0.0)

    # fc2 + ReLU
    h2 = jnp.dot(h1, w2_ref[...], preferred_element_type=jnp.float32) + b2_ref[...]
    h2 = jnp.maximum(h2, 0.0)

    # fc_mu + tanh   (output columns are zero-padded to a lane-dense width)
    mu = jnp.dot(h2, w3_ref[...], preferred_element_type=jnp.float32) + b3_ref[...]
    mu = jnp.tanh(mu)

    # affine output scaling with baked-in constants (single VPU fma epilogue)
    o_ref[...] = mu * action_scale + action_bias


def actor_forward(x, params, action_scale, action_bias, *, batch_tile=256):
    """x: (B, obs_dim) float32.  params: dict of (in, out)-layout weights + (1, out) biases.

    Returns (B, act_dim) float32 actions.
    """
    B, obs_dim = x.shape
    hid = params["w1"].shape[1]
    act_dim = params["w3"].shape[1]

    # ---- lane-dense output: pad act dim up to a multiple of 128 --------------
    act_pad = ((act_dim + 127) // 128) * 128
    w3, b3 = params["w3"], params["b3"]
    if act_pad != act_dim:
        w3 = jnp.pad(w3, ((0, 0), (0, act_pad - act_dim)))
        b3 = jnp.pad(b3, ((0, 0), (0, act_pad - act_dim)))

    # ---- batch tiling: sublane-aligned tile, round B up to a multiple of it --
    tb = min(batch_tile, max(8, ((B + 7) // 8) * 8))
    b_pad = pl.cdiv(B, tb) * tb
    x_p = x if b_pad == B else jnp.pad(x, ((0, b_pad - B), (0, 0)))

    kernel = functools.partial(
        actor_kernel,
        action_scale=float(action_scale),
        action_bias=float(action_bias),
    )

    out = pl.pallas_call(
        kernel,
        out_shape=jax.ShapeDtypeStruct((b_pad, act_pad), jnp.float32),
        grid_spec=pltpu.PrefetchScalarGridSpec(
            num_scalar_prefetch=0,
            grid=(b_pad // tb,),
            in_specs=[
                pl.BlockSpec((tb, obs_dim), lambda i: (i, 0)),   # x: streamed per batch tile
                pl.BlockSpec((obs_dim, hid), lambda i: (0, 0)),  # w1: VMEM-resident
                pl.BlockSpec((1, hid),       lambda i: (0, 0)),  # b1
                pl.BlockSpec((hid, hid),     lambda i: (0, 0)),  # w2
                pl.BlockSpec((1, hid),       lambda i: (0, 0)),  # b2
                pl.BlockSpec((hid, act_pad), lambda i: (0, 0)),  # w3 (lane-padded)
                pl.BlockSpec((1, act_pad),   lambda i: (0, 0)),  # b3 (lane-padded)
            ],
            out_specs=pl.BlockSpec((tb, act_pad), lambda i: (i, 0)),
        ),
        compiler_params=pltpu.CompilerParams(
            # batch tiles are independent -> shard across TensorCores on v7x
            dimension_semantics=("parallel",),
        ),
    )(x_p, params["w1"], params["b1"], params["w2"], params["b2"], w3, b3)

    return out[:B, :act_dim]


def init_actor_params(key, obs_dim, n_hidden, act_dim):
    """PyTorch-style uniform(-1/sqrt(fan_in), 1/sqrt(fan_in)) init.
    Weights are stored as (in, out) — transposed relative to nn.Linear."""
    def linear(key, fan_in, fan_out):
        kw, kb = jax.random.split(key)
        bound = 1.0 / jnp.sqrt(fan_in)
        w = jax.random.uniform(kw, (fan_in, fan_out), jnp.float32, -bound, bound)
        b = jax.random.uniform(kb, (1, fan_out), jnp.float32, -bound, bound)
        return w, b

    k1, k2, k3 = jax.random.split(key, 3)
    w1, b1 = linear(k1, obs_dim, n_hidden)
    w2, b2 = linear(k2, n_hidden, n_hidden)
    w3, b3 = linear(k3, n_hidden, act_dim)
    return {"w1": w1, "b1": b1, "w2": w2, "b2": b2, "w3": w3, "b3": b3}


def reference_forward(x, params, action_scale, action_bias):
    h1 = jax.nn.relu(x @ params["w1"] + params["b1"])
    h2 = jax.nn.relu(h1 @ params["w2"] + params["b2"])
    mu = jnp.tanh(h2 @ params["w3"] + params["b3"])
    return mu * action_scale + action_bias


if __name__ == "__main__":
    # MPE-style agent: obs_dim=16, act_dim=8, hidden=256 (module default n_hidden).
    # Batch = 128 with batch_tile=64 -> grid of 2 independent (parallel) batch tiles,
    # weights VMEM-resident across the whole grid.
    B, OBS, HID, ACT = 128, 16, 256, 8

    key = jax.random.PRNGKey(0)
    k_params, k_x = jax.random.split(key)

    params = init_actor_params(k_params, OBS, HID, ACT)
    x = jax.random.normal(k_x, (B, OBS), jnp.float32)

    # MPE continuous actions: low=0.0, high=1.0  ->  scale=0.5, bias=0.5
    action_scale = 0.5
    action_bias = 0.5

    out = actor_forward(x, params, action_scale, action_bias, batch_tile=64)
    out = jax.block_until_ready(out)

    ref = reference_forward(x, params, action_scale, action_bias)
    assert out.shape == (B, ACT)
    assert jnp.allclose(out, ref, atol=2e-5, rtol=2e-5), "mismatch vs JAX reference"

    print("KERNEL_OK")
</pallas_src>

<mosaic_0001>
module attributes {stable_mosaic.version = 11 : i64} {
  func.func @actor_kernel(%arg0: i32, %arg1: memref<64x16xf32, #tpu.memory_space<vmem>>, %arg2: memref<16x256xf32, #tpu.memory_space<vmem>>, %arg3: memref<1x256xf32, #tpu.memory_space<vmem>>, %arg4: memref<256x256xf32, #tpu.memory_space<vmem>>, %arg5: memref<1x256xf32, #tpu.memory_space<vmem>>, %arg6: memref<256x128xf32, #tpu.memory_space<vmem>>, %arg7: memref<1x128xf32, #tpu.memory_space<vmem>>, %arg8: memref<64x128xf32, #tpu.memory_space<vmem>>) attributes {dimension_semantics = [#tpu.dimension_semantics<parallel>], iteration_bounds = array<i64: 2>, scalar_prefetch = 0 : i64, scratch_operands = 0 : i64, tpu.core_type = #tpu.core_type<tc>, window_params = [{transform_indices = @transform_0, window_bounds = array<i64: 64, 16>}, {pipeline_mode = #tpu.pipeline_mode<synchronous>, transform_indices = @transform_1, window_bounds = array<i64: 16, 256>}, {pipeline_mode = #tpu.pipeline_mode<synchronous>, transform_indices = @transform_2, window_bounds = array<i64: 1, 256>}, {pipeline_mode = #tpu.pipeline_mode<synchronous>, transform_indices = @transform_3, window_bounds = array<i64: 256, 256>}, {pipeline_mode = #tpu.pipeline_mode<synchronous>, transform_indices = @transform_4, window_bounds = array<i64: 1, 256>}, {pipeline_mode = #tpu.pipeline_mode<synchronous>, transform_indices = @transform_5, window_bounds = array<i64: 256, 128>}, {pipeline_mode = #tpu.pipeline_mode<synchronous>, transform_indices = @transform_6, window_bounds = array<i64: 1, 128>}, {transform_indices = @transform_7, window_bounds = array<i64: 64, 128>}]} {
    %c0 = arith.constant 0 : index
    %c0_0 = arith.constant 0 : index
    %0 = vector.load %arg1[%c0, %c0_0] : memref<64x16xf32, #tpu.memory_space<vmem>>, vector<64x16xf32>
    %c0_1 = arith.constant 0 : index
    %c0_2 = arith.constant 0 : index
    %1 = vector.load %arg2[%c0_1, %c0_2] : memref<16x256xf32, #tpu.memory_space<vmem>>, vector<16x256xf32>
    %cst = arith.constant dense<0.000000e+00> : vector<64x256xf32>
    %2 = tpu.matmul %0, %1, %cst {dimension_numbers = #tpu.dot_dimension_numbers<[1], [0], [0], [1], [0, 0, 1, 1], [], []>} : vector<64x16xf32>, vector<16x256xf32>, vector<64x256xf32> -> vector<64x256xf32>
    %c0_3 = arith.constant 0 : index
    %c0_4 = arith.constant 0 : index
    %3 = vector.load %arg3[%c0_3, %c0_4] : memref<1x256xf32, #tpu.memory_space<vmem>>, vector<1x256xf32>
    %4 = vector.broadcast %3 : vector<1x256xf32> to vector<64x256xf32>
    %5 = arith.addf %2, %4 : vector<64x256xf32>
    %cst_5 = arith.constant 0.000000e+00 : f32
    %6 = vector.broadcast %cst_5 : f32 to vector<64x256xf32>
    %7 = arith.maximumf %5, %6 : vector<64x256xf32>
    %c0_6 = arith.constant 0 : index
    %c0_7 = arith.constant 0 : index
    %8 = vector.load %arg4[%c0_6, %c0_7] : memref<256x256xf32, #tpu.memory_space<vmem>>, vector<256x256xf32>
    %cst_8 = arith.constant dense<0.000000e+00> : vector<64x256xf32>
    %9 = tpu.matmul %7, %8, %cst_8 {dimension_numbers = #tpu.dot_dimension_numbers<[1], [0], [0], [1], [0, 0, 1, 1], [], []>} : vector<64x256xf32>, vector<256x256xf32>, vector<64x256xf32> -> vector<64x256xf32>
    %c0_9 = arith.constant 0 : index
    %c0_10 = arith.constant 0 : index
    %10 = vector.load %arg5[%c0_9, %c0_10] : memref<1x256xf32, #tpu.memory_space<vmem>>, vector<1x256xf32>
    %11 = vector.broadcast %10 : vector<1x256xf32> to vector<64x256xf32>
    %12 = arith.addf %9, %11 : vector<64x256xf32>
    %cst_11 = arith.constant 0.000000e+00 : f32
    %13 = vector.broadcast %cst_11 : f32 to vector<64x256xf32>
    %14 = arith.maximumf %12, %13 : vector<64x256xf32>
    %c0_12 = arith.constant 0 : index
    %c0_13 = arith.constant 0 : index
    %15 = vector.load %arg6[%c0_12, %c0_13] : memref<256x128xf32, #tpu.memory_space<vmem>>, vector<256x128xf32>
    %cst_14 = arith.constant dense<0.000000e+00> : vector<64x128xf32>
    %16 = tpu.matmul %14, %15, %cst_14 {dimension_numbers = #tpu.dot_dimension_numbers<[1], [0], [0], [1], [0, 0, 1, 1], [], []>} : vector<64x256xf32>, vector<256x128xf32>, vector<64x128xf32> -> vector<64x128xf32>
    %c0_15 = arith.constant 0 : index
    %c0_16 = arith.constant 0 : index
    %17 = vector.load %arg7[%c0_15, %c0_16] : memref<1x128xf32, #tpu.memory_space<vmem>>, vector<1x128xf32>
    %18 = vector.broadcast %17 : vector<1x128xf32> to vector<64x128xf32>
    %19 = arith.addf %16, %18 : vector<64x128xf32>
    %20 = math.tanh %19 : vector<64x128xf32>
    %cst_17 = arith.constant 5.000000e-01 : f32
    %21 = vector.broadcast %cst_17 : f32 to vector<64x128xf32>
    %22 = arith.mulf %20, %21 : vector<64x128xf32>
    %cst_18 = arith.constant 5.000000e-01 : f32
    %23 = vector.broadcast %cst_18 : f32 to vector<64x128xf32>
    %24 = arith.addf %22, %23 : vector<64x128xf32>
    %c0_19 = arith.constant 0 : index
    %c0_20 = arith.constant 0 : index
    %25 = vector.load %arg8[%c0_19, %c0_20] : memref<64x128xf32, #tpu.memory_space<vmem>>, vector<64x128xf32>
    tpu.vector_store %arg8[%c0_19, %c0_20], %24 {strides = array<i32>} : memref<64x128xf32, #tpu.memory_space<vmem>>, vector<64x128xf32>,
    return
  }
  func.func @transform_0(%arg0: i32) -> (i32, i32) {
    %c0_i32 = arith.constant 0 : i32
    %c0_i32_0 = arith.constant 0 : i32
    return %arg0, %c0_i32 : i32, i32
  }
  func.func @transform_1(%arg0: i32) -> (i32, i32) {
    %c0_i32 = arith.constant 0 : i32
    %c0_i32_0 = arith.constant 0 : i32
    %c0_i32_1 = arith.constant 0 : i32
    return %c0_i32, %c0_i32_0 : i32, i32
  }
  func.func @transform_2(%arg0: i32) -> (i32, i32) {
    %c0_i32 = arith.constant 0 : i32
    %c0_i32_0 = arith.constant 0 : i32
    %c0_i32_1 = arith.constant 0 : i32
    return %c0_i32, %c0_i32_0 : i32, i32
  }
  func.func @transform_3(%arg0: i32) -> (i32, i32) {
    %c0_i32 = arith.constant 0 : i32
    %c0_i32_0 = arith.constant 0 : i32
    %c0_i32_1 = arith.constant 0 : i32
    return %c0_i32, %c0_i32_0 : i32, i32
  }
  func.func @transform_4(%arg0: i32) -> (i32, i32) {
    %c0_i32 = arith.constant 0 : i32
    %c0_i32_0 = arith.constant 0 : i32
    %c0_i32_1 = arith.constant 0 : i32
    return %c0_i32, %c0_i32_0 : i32, i32
  }
  func.func @transform_5(%arg0: i32) -> (i32, i32) {
    %c0_i32 = arith.constant 0 : i32
    %c0_i32_0 = arith.constant 0 : i32
    %c0_i32_1 = arith.constant 0 : i32
    return %c0_i32, %c0_i32_0 : i32, i32
  }
  func.func @transform_6(%arg0: i32) -> (i32, i32) {
    %c0_i32 = arith.constant 0 : i32
    %c0_i32_0 = arith.constant 0 : i32
    %c0_i32_1 = arith.constant 0 : i32
    return %c0_i32, %c0_i32_0 : i32, i32
  }
  func.func @transform_7(%arg0: i32) -> (i32, i32) {
    %c0_i32 = arith.constant 0 : i32
    %c0_i32_0 = arith.constant 0 : i32
    return %arg0, %c0_i32 : i32, i32
  }
}

</mosaic_0001>

<llo_original>
// kernel: tpu_custom_call.1
$region0: #{tpu_custom_call.1}
  #allocation0 [shape = 'u32[]', space=smem, size = 0x4, offset = 0x4, fixed_abs, tag = 'smem constant byte address 0x4 - core index']
  #allocation1 [shape = 'u32[144,128]{1,0:T(1,128)}', space=vmem, size = 0x12000, scoped, tag = 'internal scratch']
  %s0 = inlined_call_operand.vmem [shape: f32[128,16], index: 0, kind: input, shape index: {}]
  %s1 = inlined_call_operand.vmem [shape: f32[16,256], index: 1, kind: input, shape index: {}]
  %s2 = inlined_call_operand.vmem [shape: f32[1,256], index: 2, kind: input, shape index: {}]
  %s3 = inlined_call_operand.hbm [shape: f32[256,256], index: 3, kind: input, shape index: {}]
  %s4 = inlined_call_operand.vmem [shape: f32[1,256], index: 4, kind: input, shape index: {}]
  %s5 = inlined_call_operand.hbm [shape: f32[256,128], index: 5, kind: input, shape index: {}]
  %s6 = inlined_call_operand.vmem [shape: f32[1,128], index: 6, kind: input, shape index: {}]
  %s7 = inlined_call_operand.hbm [shape: f32[128,128], index: 7, kind: output, shape index: {}]
  %s8 = sld [smem:[#allocation0]]
  $region69: #{tpu_custom_call.1} parent=0
    _
  %s10 = ssub.s32 1, %s8
  %s11 = scalar_select 0, %s10, %s8
  $region1: #{tpu_custom_call.1} parent=0
    #allocation2 [shape = 'u8[262144]{0}', space=vmem, size = 0x40000, scoped, tag = 'input window, operand 3, single buffered']
    #allocation3 [shape = 's32[2]{0}', space=sflag, size = 0x8, scoped, tag = 'scoped memory for tpu_custom_call.1']
    #allocation4 [shape = 's32[2]{0}', space=sflag, size = 0x8, scoped, tag = 'scoped memory for tpu_custom_call.1']
    #allocation5 [shape = 'u8[131072]{0}', space=vmem, size = 0x20000, scoped, tag = 'input window, operand 5, single buffered']
    #allocation6 [shape = 's32[1]{0}', space=sflag, size = 0x4, scoped, tag = 'scoped memory for tpu_custom_call.1']
    #allocation7 [shape = 'u8[65536]{0}', space=vmem, size = 0x10000, scoped, tag = 'output window, operand 0']
    %12 = vsyncpa [#allocation3], 0
    %13 = vsyncpa [#allocation6], 0
    %14 = vsyncpa [#allocation4], 0
    %s15 = scalar_lea.sflag [#allocation4], 1
    %16 = vsyncpa %s15, 0
    loop: start=0, step=1, limit=4
    $region2: #{tpu_custom_call.1} parent=1 // loop_pre_header
      _
    $region3: #{tpu_custom_call.1} parent=1 // loop_header
      %s18 = sphi 0, %s22
      %p19 = scmp.ge.s32.totalorder %s18, 4
      %s28 = sphi 0, %s30
      %s31 = sphi 0, %s28
      %s32 = sphi 0, %s31
      %s48 = sphi 0, %s32
      %s52 = sphi 0, %s52
      %s54 = sphi 0, %s52
      %s55 = sphi 0, %s54
      %s69 = sphi 0, %s55
      %s73 = sphi 0, %s73
      %s75 = sphi 0, %s73
      %s76 = sphi 0, %s75
      %s90 = sphi 0, %s76
      %s94 = sphi 0, %s94
      %s96 = sphi 0, %s94
      %s97 = sphi 0, %s96
      %s111 = sphi 0, %s97
      %s115 = sphi 0, %s115
      %s117 = sphi 0, %s115
      %s118 = sphi 0, %s117
      %s132 = sphi 0, %s118
      %s136 = sphi 0, %s136
      %s138 = sphi 0, %s136
      %s139 = sphi 0, %s138
      %s153 = sphi 0, %s139
      %s157 = sphi 0, %s157
      %s159 = sphi 0, %s157
      %s160 = sphi 0, %s159
      %s174 = sphi 0, %s160
      %s180 = sphi 0, %s182
      %s183 = sphi 0, %s180
      %s184 = sphi 0, %s183
      %s200 = sphi 0, %s184
    $region4: #{tpu_custom_call.1} parent=1 // loop_header_branch
      %21 = sbr.rel (%p19) target = $region8
    $region5: #{tpu_custom_call.1} parent=1 // loop_body
      %s23 = ssub.s32 %s18, 1
      %s24 = ssub.s32 %s18, 2
      %s25 = sadd.s32 %s18, 1
      %s26 = ssub.s32 %s18, %s25
      %p27 = scmp.eq.s32.totalorder %s26, 0
      %s29 = sadd.s32 %s28, 1
      %s30 = scalar_select %p27, %s28, %s29
      %p33 = pneg %p27
      %p34 = scmp.eq.s32.totalorder %s18, 1
      %p35 = por %p33, %p34
      %p36 = scmp.ne.s32.totalorder %s28, %s31
      %p37 = scmp.eq.s32.totalorder %s18, 0
      %p38 = por %p36, %p37
      %p39 = scmp.ne.s32.totalorder %s28, %s31
      %p40 = scmp.eq.s32.totalorder %s23, 1
      %p41 = por %p39, %p40
      %p42 = scmp.ne.s32.totalorder %s31, %s32
      %p43 = scmp.eq.s32.totalorder %s23, 0
      %p44 = por %p42, %p43
      %p45 = scmp.ne.s32.totalorder %s31, %s32
      %p46 = scmp.eq.s32.totalorder %s24, 1
      %p47 = por %p45, %p46
      %p49 = scmp.ne.s32.totalorder %s32, %s48
      %p50 = scmp.eq.s32.totalorder %s24, 0
      %p51 = por %p49, %p50
      %s53 = sadd.s32 %s52, 1
      %p56 = scmp.eq.s32.totalorder %s18, 1
      %p57 = scmp.ne.s32.totalorder %s52, %s54
      %p58 = scmp.eq.s32.totalorder %s18, 0
      %p59 = por %p57, %p58
      %p60 = scmp.ne.s32.totalorder %s52, %s54
      %p61 = scmp.eq.s32.totalorder %s23, 1
      %p62 = por %p60, %p61
      %p63 = scmp.ne.s32.totalorder %s54, %s55
      %p64 = scmp.eq.s32.totalorder %s23, 0
      %p65 = por %p63, %p64
      %p66 = scmp.ne.s32.totalorder %s54, %s55
      %p67 = scmp.eq.s32.totalorder %s24, 1
      %p68 = por %p66, %p67
      %p70 = scmp.ne.s32.totalorder %s55, %s69
      %p71 = scmp.eq.s32.totalorder %s24, 0
      %p72 = por %p70, %p71
      %s74 = sadd.s32 %s73, 1
      %p77 = scmp.eq.s32.totalorder %s18, 1
      %p78 = scmp.ne.s32.totalorder %s73, %s75
      %p79 = scmp.eq.s32.totalorder %s18, 0
      %p80 = por %p78, %p79
      %p81 = scmp.ne.s32.totalorder %s73, %s75
      %p82 = scmp.eq.s32.totalorder %s23, 1
      %p83 = por %p81, %p82
      %p84 = scmp.ne.s32.totalorder %s75, %s76
      %p85 = scmp.eq.s32.totalorder %s23, 0
      %p86 = por %p84, %p85
      %p87 = scmp.ne.s32.totalorder %s75, %s76
      %p88 = scmp.eq.s32.totalorder %s24, 1
      %p89 = por %p87, %p88
      %p91 = scmp.ne.s32.totalorder %s76, %s90
      %p92 = scmp.eq.s32.totalorder %s24, 0
      %p93 = por %p91, %p92
      %s95 = sadd.s32 %s94, 1
      %p98 = scmp.eq.s32.totalorder %s18, 1
      %p99 = scmp.ne.s32.totalorder %s94, %s96
      %p100 = scmp.eq.s32.totalorder %s18, 0
      %p101 = por %p99, %p100
      %p102 = scmp.ne.s32.totalorder %s94, %s96
      %p103 = scmp.eq.s32.totalorder %s23, 1
      %p104 = por %p102, %p103
      %p105 = scmp.ne.s32.totalorder %s96, %s97
      %p106 = scmp.eq.s32.totalorder %s23, 0
      %p107 = por %p105, %p106
      %p108 = scmp.ne.s32.totalorder %s96, %s97
      %p109 = scmp.eq.s32.totalorder %s24, 1
      %p110 = por %p108, %p109
      %p112 = scmp.ne.s32.totalorder %s97, %s111
      %p113 = scmp.eq.s32.totalorder %s24, 0
      %p114 = por %p112, %p113
      %s116 = sadd.s32 %s115, 1
      %p119 = scmp.eq.s32.totalorder %s18, 1
      %p120 = scmp.ne.s32.totalorder %s115, %s117
      %p121 = scmp.eq.s32.totalorder %s18, 0
      %p122 = por %p120, %p121
      %p123 = scmp.ne.s32.totalorder %s115, %s117
      %p124 = scmp.eq.s32.totalorder %s23, 1
      %p125 = por %p123, %p124
      %p126 = scmp.ne.s32.totalorder %s117, %s118
      %p127 = scmp.eq.s32.totalorder %s23, 0
      %p128 = por %p126, %p127
      %p129 = scmp.ne.s32.totalorder %s117, %s118
      %p130 = scmp.eq.s32.totalorder %s24, 1
      %p131 = por %p129, %p130
      %p133 = scmp.ne.s32.totalorder %s118, %s132
      %p134 = scmp.eq.s32.totalorder %s24, 0
      %p135 = por %p133, %p134
      %s137 = sadd.s32 %s136, 1
      %p140 = scmp.eq.s32.totalorder %s18, 1
      %p141 = scmp.ne.s32.totalorder %s136, %s138
      %p142 = scmp.eq.s32.totalorder %s18, 0
      %p143 = por %p141, %p142
      %p144 = scmp.ne.s32.totalorder %s136, %s138
      %p145 = scmp.eq.s32.totalorder %s23, 1
      %p146 = por %p144, %p145
      %p147 = scmp.ne.s32.totalorder %s138, %s139
      %p148 = scmp.eq.s32.totalorder %s23, 0
      %p149 = por %p147, %p148
      %p150 = scmp.ne.s32.totalorder %s138, %s139
      %p151 = scmp.eq.s32.totalorder %s24, 1
      %p152 = por %p150, %p151
      %p154 = scmp.ne.s32.totalorder %s139, %s153
      %p155 = scmp.eq.s32.totalorder %s24, 0
      %p156 = por %p154, %p155
      %s158 = sadd.s32 %s157, 1
      %p161 = scmp.eq.s32.totalorder %s18, 1
      %p162 = scmp.ne.s32.totalorder %s157, %s159
      %p163 = scmp.eq.s32.totalorder %s18, 0
      %p164 = por %p162, %p163
      %p165 = scmp.ne.s32.totalorder %s157, %s159
      %p166 = scmp.eq.s32.totalorder %s23, 1
      %p167 = por %p165, %p166
      %p168 = scmp.ne.s32.totalorder %s159, %s160
      %p169 = scmp.eq.s32.totalorder %s23, 0
      %p170 = por %p168, %p169
      %p171 = scmp.ne.s32.totalorder %s159, %s160
      %p172 = scmp.eq.s32.totalorder %s24, 1
      %p173 = por %p171, %p172
      %p175 = scmp.ne.s32.totalorder %s160, %s174
      %p176 = scmp.eq.s32.totalorder %s24, 0
      %p177 = por %p175, %p176
      %s178 = ssub.s32 %s18, %s25
      %p179 = scmp.eq.s32.totalorder %s178, 0
      %s181 = sadd.s32 %s180, 1
      %s182 = scalar_select %p179, %s180, %s181
      %p185 = pneg %p179
      %p186 = scmp.eq.s32.totalorder %s18, 1
      %p187 = por %p185, %p186
      %p188 = scmp.ne.s32.totalorder %s180, %s183
      %p189 = scmp.eq.s32.totalorder %s18, 0
      %p190 = por %p188, %p189
      %p191 = scmp.ne.s32.totalorder %s180, %s183
      %p192 = scmp.eq.s32.totalorder %s23, 1
      %p193 = por %p191, %p192
      %p194 = scmp.ne.s32.totalorder %s183, %s184
      %p195 = scmp.eq.s32.totalorder %s23, 0
      %p196 = por %p194, %p195
      %p197 = scmp.ne.s32.totalorder %s183, %s184
      %p198 = scmp.eq.s32.totalorder %s24, 1
      %p199 = por %p197, %p198
      %p201 = scmp.ne.s32.totalorder %s184, %s200
      %p202 = scmp.eq.s32.totalorder %s24, 0
      %p203 = por %p201, %p202
      %p204 = scmp.le.s32.totalorder 1, %s18
      %p205 = scmp.lt.s32.totalorder %s18, 3
      %p206 = pnand %p204, %p205
      %p207 = pneg %p206
      // Predicated region
      $region9: #{tpu_custom_call.1} parent=5 // pred_check
        _
      $region10: #{tpu_custom_call.1} parent=5 // pred_check_branch
        %209 = sbr.rel (%p206) target = $region12
      $region11: #{tpu_custom_call.1} parent=5 // pred_region
        %s210 = ssub.s32 %s18, 1
        // Predicated region
        $region13: #{tpu_custom_call.1} parent=11 // pred_check
          %p211 = pneg %p65
        $region14: #{tpu_custom_call.1} parent=11 // pred_check_branch
          %213 = sbr.rel (%p211) target = $region16
        $region15: #{tpu_custom_call.1} parent=11 // pred_region
          _
        $region16: #{tpu_custom_call.1} parent=11 // pred_fallthru
          _
        // Predicated region
        $region17: #{tpu_custom_call.1} parent=11 // pred_check
          %p214 = pneg %p86
        $region18: #{tpu_custom_call.1} parent=11 // pred_check_branch
          %216 = sbr.rel (%p214) target = $region20
        $region19: #{tpu_custom_call.1} parent=11 // pred_region
          _
        $region20: #{tpu_custom_call.1} parent=11 // pred_fallthru
          _
        // Predicated region
        $region21: #{tpu_custom_call.1} parent=11 // pred_check
          %p217 = pneg %p107
        $region22: #{tpu_custom_call.1} parent=11 // pred_check_branch
          %219 = sbr.rel (%p217) target = $region24
        $region23: #{tpu_custom_call.1} parent=11 // pred_region
          %s221 = ssub.s32 8192, 8192
          %222 = vsyncadd [#allocation3], %s221
          %s223 = sshll.u32 [#allocation2], 4
          %s224 = int_to_ptr.vmem [resolvable:$true] %s223
          %229 = dma.hbm_to_vmem [thread:$0]  %s3, 8192, %s224, [#allocation3], 256, 256, 16
        $region24: #{tpu_custom_call.1} parent=11 // pred_fallthru
          _
        // Predicated region
        $region25: #{tpu_custom_call.1} parent=11 // pred_check
          %p230 = pneg %p128
        $region26: #{tpu_custom_call.1} parent=11 // pred_check_branch
          %232 = sbr.rel (%p230) target = $region28
        $region27: #{tpu_custom_call.1} parent=11 // pred_region
          _
        $region28: #{tpu_custom_call.1} parent=11 // pred_fallthru
          _
        // Predicated region
        $region29: #{tpu_custom_call.1} parent=11 // pred_check
          %p233 = pneg %p149
        $region30: #{tpu_custom_call.1} parent=11 // pred_check_branch
          %235 = sbr.rel (%p233) target = $region32
        $region31: #{tpu_custom_call.1} parent=11 // pred_region
          %s237 = ssub.s32 4096, 4096
          %238 = vsyncadd [#allocation6], %s237
          %s239 = sshll.u32 [#allocation5], 4
          %s240 = int_to_ptr.vmem [resolvable:$true] %s239
          %245 = dma.hbm_to_vmem [thread:$0]  %s5, 4096, %s240, [#allocation6], 128, 128, 8
        $region32: #{tpu_custom_call.1} parent=11 // pred_fallthru
          _
        // Predicated region
        $region33: #{tpu_custom_call.1} parent=11 // pred_check
          %p246 = pneg %p170
        $region34: #{tpu_custom_call.1} parent=11 // pred_check_branch
          %248 = sbr.rel (%p246) target = $region36
        $region35: #{tpu_custom_call.1} parent=11 // pred_region
          _
        $region36: #{tpu_custom_call.1} parent=11 // pred_fallthru
          _
      $region12: #{tpu_custom_call.1} parent=5 // pred_fallthru
        _
      %p249 = scmp.lt.s32.totalorder %s18, 2
      // Predicated region
      $region37: #{tpu_custom_call.1} parent=5 // pred_check
        %p250 = pneg %p249
      $region38: #{tpu_custom_call.1} parent=5 // pred_check_branch
        %252 = sbr.rel (%p250) target = $region40
      $region39: #{tpu_custom_call.1} parent=5 // pred_region
        // Predicated region
        $region41: #{tpu_custom_call.1} parent=39 // pred_check
          %p253 = pneg %p38
        $region42: #{tpu_custom_call.1} parent=39 // pred_check_branch
          %255 = sbr.rel (%p253) target = $region44
        $region43: #{tpu_custom_call.1} parent=39 // pred_region
          %s256 = smul.u32 8, %s18
          %p257 = scmp.lt.s32.totalorder %s256, 15
          %s258 = scalar_select %p257, %s256, 15
          %s259 = smul.addr %s258, 8
          %s260 = scalar_lea.vmem %s0, %s259
          %s261 = smul.u32 8, %s18
        $region44: #{tpu_custom_call.1} parent=39 // pred_fallthru
          _
      $region40: #{tpu_custom_call.1} parent=5 // pred_fallthru
        _
      %p262 = scmp.le.s32.totalorder 1, %s18
      %p263 = scmp.lt.s32.totalorder %s18, 3
      %p264 = pnand %p262, %p263
      %p265 = pneg %p264
      // Predicated region
      $region45: #{tpu_custom_call.1} parent=5 // pred_check
        _
      $region46: #{tpu_custom_call.1} parent=5 // pred_check_branch
        %267 = sbr.rel (%p264) target = $region48
      $region47: #{tpu_custom_call.1} parent=5 // pred_region
        %s268 = ssub.s32 %s18, 1
        // Predicated region
        $region49: #{tpu_custom_call.1} parent=47 // pred_check
          %p269 = pneg %p107
        $region50: #{tpu_custom_call.1} parent=47 // pred_check_branch
          %271 = sbr.rel (%p269) target = $region52
        $region51: #{tpu_custom_call.1} parent=47 // pred_region
          %272 = dma.done [#allocation3], 8192
        $region52: #{tpu_custom_call.1} parent=47 // pred_fallthru
          _
        // Predicated region
        $region53: #{tpu_custom_call.1} parent=47 // pred_check
          %p273 = pneg %p149
        $region54: #{tpu_custom_call.1} parent=47 // pred_check_branch
          %275 = sbr.rel (%p273) target = $region56
        $region55: #{tpu_custom_call.1} parent=47 // pred_region
          %276 = dma.done [#allocation6], 4096
        $region56: #{tpu_custom_call.1} parent=47 // pred_fallthru
          _
        %s277 = smul.u32 8, %s23
        %p278 = scmp.lt.s32.totalorder %s277, 15
        %s279 = scalar_select %p278, %s277, 15
        %s280 = smul.addr %s279, 8
        %s281 = scalar_lea.vmem %s0, %s280
        %p282 = pneg %p44
        %p283 = pneg %p41
        %p284 = pneg %p65
        %p285 = pneg %p62
        %p286 = pneg %p86
        %p287 = pneg %p83
        %p288 = pneg %p107
        %p289 = pneg %p104
        %p290 = pneg %p128
        %p291 = pneg %p125
        %p292 = pneg %p149
        %p293 = pneg %p146
        %p294 = pneg %p170
        %p295 = pneg %p167
        %p296 = pneg %p196
        %p297 = pneg %p193
        %s298 = sand.u32 %s183, 1
        %s299 = scalar_lea.sflag [#allocation4], %s298
        %s300 = sand.u32 %s183, 1
        %s301 = smul.addr %s300, 64
        %s302 = scalar_lea.vmem [#allocation7], %s301
        %s303 = smul.u32 8, %s23
        %p304 = scmp.lt.s32.totalorder %s303, 15
        %s305 = scalar_select %p304, %s303, 15
        %s306 = smul.addr %s305, 8
        %s307 = scalar_lea.vmem %s0, %s306
        %s308 = smul.u32 8, %s23
        %s309 = smul.u32 8, %s23
        %v310 = vld [vmem:[%s307] sm:$0xff]
        %v311 = vld [vmem:[%s307 + $0x8] sm:$0xff]
        %v312 = vld [vmem:[%s307 + $0x10] sm:$0xff]
        %v313 = vld [vmem:[%s307 + $0x18] sm:$0xff]
        %v314 = vld [vmem:[%s307 + $0x20] sm:$0xff]
        %v315 = vld [vmem:[%s307 + $0x28] sm:$0xff]
        %v316 = vld [vmem:[%s307 + $0x30] sm:$0xff]
        %v317 = vld [vmem:[%s307 + $0x38] sm:$0xff]
        %v318 = vld [vmem:[%s1] sm:$0xff]
        %v319 = vld [vmem:[%s1 + $0x8] sm:$0xff]
        %v320 = vld [vmem:[%s1 + $0x10] sm:$0xff]
        %v321 = vld [vmem:[%s1 + $0x18] sm:$0xff]
        %v322 = vld [vmem:[%s2] sm:$0x3]
        %v324 = vlaneseq
        %v325 = vshrl.u32 %v324, 7
        %v326 = vsub.s32 0, %v325
        %v327 = vrot.slane %v322, %v326
        %v328 = vlaneseq
        %v329 = vshrl.u32 %v328, 7
        %v330 = vsub.s32 1, %v329
        %v331 = vrot.slane %v322, %v330
        %vm334 = vcmask 130048
        %v336 = vsel %vm334, %v310, 0
        %v339 = vsel %vm334, %v311, 0
        %v342 = vsel %vm334, %v312, 0
        %v345 = vsel %vm334, %v313, 0
        %v348 = vsel %vm334, %v314, 0
        %v351 = vsel %vm334, %v315, 0
        %v354 = vsel %vm334, %v316, 0
        %v357 = vsel %vm334, %v317, 0
        %359 = vmatprep.subr.mxu0 %v319
        %360 = vmatpush1.msra.mxu0 %v318
        %361 = vmatprep.subr.mxu0 %v321
        %362 = vmatpush1.msra.mxu0 %v320
        %363 = vmatprep.subr.mxu0 0.0
        %364 = vmatpush1.msra.mxu0 0.0
        %365 = vmatprep.subr.mxu0 0.0
        %366 = vmatpush1.msra.mxu0 0.0
        %367 = vmatprep.subr.mxu0 0.0
        %368 = vmatpush1.msra.mxu0 0.0
        %369 = vmatprep.subr.mxu0 0.0
        %370 = vmatpush1.msra.mxu0 0.0
        %371 = vmatprep.subr.mxu0 0.0
        %372 = vmatpush1.msra.mxu0 0.0
        %373 = vmatprep.subr.mxu0 0.0
        %374 = vmatpush1.msra.mxu0 0.0
        %375 = vmatprep.subr.mxu0 0.0
        %376 = vmatpush1.msra.mxu0 0.0
        %377 = vmatprep.subr.mxu0 0.0
        %378 = vmatpush1.msra.mxu0 0.0
        %379 = vmatprep.subr.mxu0 0.0
        %380 = vmatpush1.msra.mxu0 0.0
        %381 = vmatprep.subr.mxu0 0.0
        %382 = vmatpush1.msra.mxu0 0.0
        %383 = vmatprep.subr.mxu0 0.0
        %384 = vmatpush1.msra.mxu0 0.0
        %385 = vmatprep.subr.mxu0 0.0
        %386 = vmatpush1.msra.mxu0 0.0
        %387 = vmatprep.subr.mxu0 0.0
        %388 = vmatpush1.msra.mxu0 0.0
        %389 = vmatprep.subr.mxu0 0.0
        %390 = vmatpush1.msra.mxu0 0.0
        %391 = vmatprep.subr.mxu0 0.0
        %392 = vmatpush1.msra.mxu0 0.0
        %393 = vmatprep.subr.mxu0 0.0
        %394 = vmatpush1.msra.mxu0 0.0
        %395 = vmatprep.subr.mxu0 0.0
        %396 = vmatpush1.msra.mxu0 0.0
        %397 = vmatprep.subr.mxu0 0.0
        %398 = vmatpush1.msra.mxu0 0.0
        %399 = vmatprep.subr.mxu0 0.0
        %400 = vmatpush1.msra.mxu0 0.0
        %401 = vmatprep.subr.mxu0 0.0
        %402 = vmatpush1.msra.mxu0 0.0
        %403 = vmatprep.subr.mxu0 0.0
        %404 = vmatpush1.msra.mxu0 0.0
        %405 = vmatprep.subr.mxu0 0.0
        %406 = vmatpush1.msra.mxu0 0.0
        %407 = vmatprep.subr.mxu0 0.0
        %408 = vmatpush1.msra.mxu0 0.0
        %409 = vmatprep.subr.mxu0 0.0
        %410 = vmatpush1.msra.mxu0 0.0
        %411 = vmatprep.subr.mxu0 0.0
        %412 = vmatpush1.msra.mxu0 0.0
        %413 = vmatprep.subr.mxu0 0.0
        %414 = vmatpush1.msra.mxu0 0.0
        %415 = vmatprep.subr.mxu0 0.0
        %416 = vmatpush1.msra.mxu0 0.0
        %417 = vmatprep.subr.mxu0 0.0
        %418 = vmatpush1.msra.mxu0 0.0
        %419 = vmatprep.subr.mxu0 0.0
        %420 = vmatpush1.msra.mxu0 0.0
        %421 = vmatprep.subr.mxu0 0.0
        %422 = vmatpush1.msra.mxu0 0.0
        %423 = vmatprep.mubr.f32.mxu0 0.0
        %424 = vmatmul.mubr.f32.gmra.mrb[0].mxu0 %v336
        %v425 = vpop.f32.mrb[0].mxu0
        %v426 = vadd.f32 %v327, %v425
        %v427 = vpop.f32.mrb[0].mxu0
        %v428 = vadd.f32 %v331, %v427
        %429 = vmatprep.mubr.f32.mxu0 0.0
        %430 = vmatmul.mubr.f32.gmra.mrb[0].mxu0 %v339
        %v431 = vpop.f32.mrb[0].mxu0
        %v432 = vadd.f32 %v327, %v431
        %v433 = vpop.f32.mrb[0].mxu0
        %v434 = vadd.f32 %v331, %v433
        %435 = vmatprep.mubr.f32.mxu0 0.0
        %436 = vmatmul.mubr.f32.gmra.mrb[0].mxu0 %v342
        %v437 = vpop.f32.mrb[0].mxu0
        %v438 = vadd.f32 %v327, %v437
        %v439 = vpop.f32.mrb[0].mxu0
        %v440 = vadd.f32 %v331, %v439
        %441 = vmatprep.mubr.f32.mxu0 0.0
        %442 = vmatmul.mubr.f32.gmra.mrb[0].mxu0 %v345
        %v443 = vpop.f32.mrb[0].mxu0
        %v444 = vadd.f32 %v327, %v443
        %v445 = vpop.f32.mrb[0].mxu0
        %v446 = vadd.f32 %v331, %v445
        %447 = vmatprep.mubr.f32.mxu0 0.0
        %448 = vmatmul.mubr.f32.gmra.mrb[0].mxu0 %v348
        %v449 = vpop.f32.mrb[0].mxu0
        %v450 = vadd.f32 %v327, %v449
        %v451 = vpop.f32.mrb[0].mxu0
        %v452 = vadd.f32 %v331, %v451
        %453 = vmatprep.mubr.f32.mxu0 0.0
        %454 = vmatmul.mubr.f32.gmra.mrb[0].mxu0 %v351
        %v455 = vpop.f32.mrb[0].mxu0
        %v456 = vadd.f32 %v327, %v455
        %v457 = vpop.f32.mrb[0].mxu0
        %v458 = vadd.f32 %v331, %v457
        %459 = vmatprep.mubr.f32.mxu0 0.0
        %460 = vmatmul.mubr.f32.gmra.mrb[0].mxu0 %v354
        %v461 = vpop.f32.mrb[0].mxu0
        %v462 = vadd.f32 %v327, %v461
        %v463 = vpop.f32.mrb[0].mxu0
        %v464 = vadd.f32 %v331, %v463
        %465 = vmatprep.mubr.f32.mxu0 0.0
        %466 = vmatmul.mubr.f32.gmra.mrb[0].mxu0 %v357
        %v467 = vpop.f32.mrb[0].mxu0
        %v468 = vadd.f32 %v327, %v467
        %v469 = vpop.f32.mrb[0].mxu0
        %v470 = vadd.f32 %v331, %v469
        %471 = vdwg.mxu0
        %v472 = vmax.f32 %v426, 0.0
        %v473 = vmax.f32 %v428, 0.0
        %v474 = vmax.f32 %v432, 0.0
        %v475 = vmax.f32 %v434, 0.0
        %v476 = vmax.f32 %v438, 0.0
        %v477 = vmax.f32 %v440, 0.0
        %v478 = vmax.f32 %v444, 0.0
        %v479 = vmax.f32 %v446, 0.0
        %v480 = vmax.f32 %v450, 0.0
        %v481 = vmax.f32 %v452, 0.0
        %v482 = vmax.f32 %v456, 0.0
        %v483 = vmax.f32 %v458, 0.0
        %v484 = vmax.f32 %v462, 0.0
        %v485 = vmax.f32 %v464, 0.0
        %v486 = vmax.f32 %v468, 0.0
        %v487 = vmax.f32 %v470, 0.0
        %v488 = vld [vmem:[#allocation2] sm:$0xff]
        %v489 = vld [vmem:[#allocation2 + $0x8] sm:$0xff]
        %v490 = vld [vmem:[#allocation2 + $0x10] sm:$0xff]
        %v491 = vld [vmem:[#allocation2 + $0x18] sm:$0xff]
        %v492 = vld [vmem:[#allocation2 + $0x20] sm:$0xff]
        %v493 = vld [vmem:[#allocation2 + $0x28] sm:$0xff]
        %v494 = vld [vmem:[#allocation2 + $0x30] sm:$0xff]
        %v495 = vld [vmem:[#allocation2 + $0x38] sm:$0xff]
        %v496 = vld [vmem:[#allocation2 + $0x40] sm:$0xff]
        %v497 = vld [vmem:[#allocation2 + $0x48] sm:$0xff]
        %v498 = vld [vmem:[#allocation2 + $0x50] sm:$0xff]
        %v499 = vld [vmem:[#allocation2 + $0x58] sm:$0xff]
        %v500 = vld [vmem:[#allocation2 + $0x60] sm:$0xff]
        %v501 = vld [vmem:[#allocation2 + $0x68] sm:$0xff]
        %v502 = vld [vmem:[#allocation2 + $0x70] sm:$0xff]
        %v503 = vld [vmem:[#allocation2 + $0x78] sm:$0xff]
        %v504 = vld [vmem:[#allocation2 + $0x80] sm:$0xff]
        %v505 = vld [vmem:[#allocation2 + $0x88] sm:$0xff]
        %v506 = vld [vmem:[#allocation2 + $0x90] sm:$0xff]
        %v507 = vld [vmem:[#allocation2 + $0x98] sm:$0xff]
        %v508 = vld [vmem:[#allocation2 + $0xa0] sm:$0xff]
        %v509 = vld [vmem:[#allocation2 + $0xa8] sm:$0xff]
        %v510 = vld [vmem:[#allocation2 + $0xb0] sm:$0xff]
        %v511 = vld [vmem:[#allocation2 + $0xb8] sm:$0xff]
        %v512 = vld [vmem:[#allocation2 + $0xc0] sm:$0xff]
        %v513 = vld [vmem:[#allocation2 + $0xc8] sm:$0xff]
        %v514 = vld [vmem:[#allocation2 + $0xd0] sm:$0xff]
        %v515 = vld [vmem:[#allocation2 + $0xd8] sm:$0xff]
        %v516 = vld [vmem:[#allocation2 + $0xe0] sm:$0xff]
        %v517 = vld [vmem:[#allocation2 + $0xe8] sm:$0xff]
        %v518 = vld [vmem:[#allocation2 + $0xf0] sm:$0xff]
        %v519 = vld [vmem:[#allocation2 + $0xf8] sm:$0xff]
        %v520 = vld [vmem:[#allocation2 + $0x100] sm:$0xff]
        %v521 = vld [vmem:[#allocation2 + $0x108] sm:$0xff]
        %v522 = vld [vmem:[#allocation2 + $0x110] sm:$0xff]
        %v523 = vld [vmem:[#allocation2 + $0x118] sm:$0xff]
        %v524 = vld [vmem:[#allocation2 + $0x120] sm:$0xff]
        %v525 = vld [vmem:[#allocation2 + $0x128] sm:$0xff]
        %v526 = vld [vmem:[#allocation2 + $0x130] sm:$0xff]
        %v527 = vld [vmem:[#allocation2 + $0x138] sm:$0xff]
        %v528 = vld [vmem:[#allocation2 + $0x140] sm:$0xff]
        %v529 = vld [vmem:[#allocation2 + $0x148] sm:$0xff]
        %v530 = vld [vmem:[#allocation2 + $0x150] sm:$0xff]
        %v531 = vld [vmem:[#allocation2 + $0x158] sm:$0xff]
        %v532 = vld [vmem:[#allocation2 + $0x160] sm:$0xff]
        %v533 = vld [vmem:[#allocation2 + $0x168] sm:$0xff]
        %v534 = vld [vmem:[#allocation2 + $0x170] sm:$0xff]
        %v535 = vld [vmem:[#allocation2 + $0x178] sm:$0xff]
        %v536 = vld [vmem:[#allocation2 + $0x180] sm:$0xff]
        %v537 = vld [vmem:[#allocation2 + $0x188] sm:$0xff]
        %v538 = vld [vmem:[#allocation2 + $0x190] sm:$0xff]
        %v539 = vld [vmem:[#allocation2 + $0x198] sm:$0xff]
        %v540 = vld [vmem:[#allocation2 + $0x1a0] sm:$0xff]
        %v541 = vld [vmem:[#allocation2 + $0x1a8] sm:$0xff]
        %v542 = vld [vmem:[#allocation2 + $0x1b0] sm:$0xff]
        %v543 = vld [vmem:[#allocation2 + $0x1b8] sm:$0xff]
        %v544 = vld [vmem:[#allocation2 + $0x1c0] sm:$0xff]
        %v545 = vld [vmem:[#allocation2 + $0x1c8] sm:$0xff]
        %v546 = vld [vmem:[#allocation2 + $0x1d0] sm:$0xff]
        %v547 = vld [vmem:[#allocation2 + $0x1d8] sm:$0xff]
        %v548 = vld [vmem:[#allocation2 + $0x1e0] sm:$0xff]
        %v549 = vld [vmem:[#allocation2 + $0x1e8] sm:$0xff]
        %v550 = vld [vmem:[#allocation2 + $0x1f0] sm:$0xff]
        %v551 = vld [vmem:[#allocation2 + $0x1f8] sm:$0xff]
        %v552 = vld [vmem:[%s4] sm:$0x3]
        %v554 = vlaneseq
        %v555 = vshrl.u32 %v554, 7
        %v556 = vsub.s32 0, %v555
        %v557 = vrot.slane %v552, %v556
        %v558 = vlaneseq
        %v559 = vshrl.u32 %v558, 7
        %v560 = vsub.s32 1, %v559
        %v561 = vrot.slane %v552, %v560
        %564 = vmatprep.subr.mxu0 %v489
        %565 = vmatpush1.msra.mxu0 %v488
        %566 = vmatprep.subr.mxu0 %v491
        %567 = vmatpush1.msra.mxu0 %v490
        %568 = vmatprep.subr.mxu0 %v493
        %569 = vmatpush1.msra.mxu0 %v492
        %570 = vmatprep.subr.mxu0 %v495
        %571 = vmatpush1.msra.mxu0 %v494
        %572 = vmatprep.subr.mxu0 %v497
        %573 = vmatpush1.msra.mxu0 %v496
        %574 = vmatprep.subr.mxu0 %v499
        %575 = vmatpush1.msra.mxu0 %v498
        %576 = vmatprep.subr.mxu0 %v501
        %577 = vmatpush1.msra.mxu0 %v500
        %578 = vmatprep.subr.mxu0 %v503
        %579 = vmatpush1.msra.mxu0 %v502
        %580 = vmatprep.subr.mxu0 %v505
        %581 = vmatpush1.msra.mxu0 %v504
        %582 = vmatprep.subr.mxu0 %v507
        %583 = vmatpush1.msra.mxu0 %v506
        %584 = vmatprep.subr.mxu0 %v509
        %585 = vmatpush1.msra.mxu0 %v508
        %586 = vmatprep.subr.mxu0 %v511
        %587 = vmatpush1.msra.mxu0 %v510
        %588 = vmatprep.subr.mxu0 %v513
        %589 = vmatpush1.msra.mxu0 %v512
        %590 = vmatprep.subr.mxu0 %v515
        %591 = vmatpush1.msra.mxu0 %v514
        %592 = vmatprep.subr.mxu0 %v517
        %593 = vmatpush1.msra.mxu0 %v516
        %594 = vmatprep.subr.mxu0 %v519
        %595 = vmatpush1.msra.mxu0 %v518
        %596 = vmatprep.subr.mxu0 %v521
        %597 = vmatpush1.msra.mxu0 %v520
        %598 = vmatprep.subr.mxu0 %v523
        %599 = vmatpush1.msra.mxu0 %v522
        %600 = vmatprep.subr.mxu0 %v525
        %601 = vmatpush1.msra.mxu0 %v524
        %602 = vmatprep.subr.mxu0 %v527
        %603 = vmatpush1.msra.mxu0 %v526
        %604 = vmatprep.subr.mxu0 %v529
        %605 = vmatpush1.msra.mxu0 %v528
        %606 = vmatprep.subr.mxu0 %v531
        %607 = vmatpush1.msra.mxu0 %v530
        %608 = vmatprep.subr.mxu0 %v533
        %609 = vmatpush1.msra.mxu0 %v532
        %610 = vmatprep.subr.mxu0 %v535
        %611 = vmatpush1.msra.mxu0 %v534
        %612 = vmatprep.subr.mxu0 %v537
        %613 = vmatpush1.msra.mxu0 %v536
        %614 = vmatprep.subr.mxu0 %v539
        %615 = vmatpush1.msra.mxu0 %v538
        %616 = vmatprep.subr.mxu0 %v541
        %617 = vmatpush1.msra.mxu0 %v540
        %618 = vmatprep.subr.mxu0 %v543
        %619 = vmatpush1.msra.mxu0 %v542
        %620 = vmatprep.subr.mxu0 %v545
        %621 = vmatpush1.msra.mxu0 %v544
        %622 = vmatprep.subr.mxu0 %v547
        %623 = vmatpush1.msra.mxu0 %v546
        %624 = vmatprep.subr.mxu0 %v549
        %625 = vmatpush1.msra.mxu0 %v548
        %626 = vmatprep.subr.mxu0 %v551
        %627 = vmatpush1.msra.mxu0 %v550
        %628 = vmatprep.mubr.f32.mxu0 %v473
        %629 = vmatmul.mubr.f32.gmra.mrb[0].mxu0 %v472
        %v630 = vpop.f32.mrb[0].mxu0
        %v631 = vadd.f32 %v557, %v630
        %v632 = vpop.f32.mrb[0].mxu0
        %v633 = vadd.f32 %v561, %v632
        %634 = vmatprep.mubr.f32.mxu0 %v475
        %635 = vmatmul.mubr.f32.gmra.mrb[0].mxu0 %v474
        %v636 = vpop.f32.mrb[0].mxu0
        %v637 = vadd.f32 %v557, %v636
        %v638 = vpop.f32.mrb[0].mxu0
        %v639 = vadd.f32 %v561, %v638
        %640 = vmatprep.mubr.f32.mxu0 %v477
        %641 = vmatmul.mubr.f32.gmra.mrb[0].mxu0 %v476
        %v642 = vpop.f32.mrb[0].mxu0
        %v643 = vadd.f32 %v557, %v642
        %v644 = vpop.f32.mrb[0].mxu0
        %v645 = vadd.f32 %v561, %v644
        %646 = vmatprep.mubr.f32.mxu0 %v479
        %647 = vmatmul.mubr.f32.gmra.mrb[0].mxu0 %v478
        %v648 = vpop.f32.mrb[0].mxu0
        %v649 = vadd.f32 %v557, %v648
        %v650 = vpop.f32.mrb[0].mxu0
        %v651 = vadd.f32 %v561, %v650
        %652 = vmatprep.mubr.f32.mxu0 %v481
        %653 = vmatmul.mubr.f32.gmra.mrb[0].mxu0 %v480
        %v654 = vpop.f32.mrb[0].mxu0
        %v655 = vadd.f32 %v557, %v654
        %v656 = vpop.f32.mrb[0].mxu0
        %v657 = vadd.f32 %v561, %v656
        %658 = vmatprep.mubr.f32.mxu0 %v483
        %659 = vmatmul.mubr.f32.gmra.mrb[0].mxu0 %v482
        %v660 = vpop.f32.mrb[0].mxu0
        %v661 = vadd.f32 %v557, %v660
        %v662 = vpop.f32.mrb[0].mxu0
        %v663 = vadd.f32 %v561, %v662
        %664 = vmatprep.mubr.f32.mxu0 %v485
        %665 = vmatmul.mubr.f32.gmra.mrb[0].mxu0 %v484
        %v666 = vpop.f32.mrb[0].mxu0
        %v667 = vadd.f32 %v557, %v666
        %v668 = vpop.f32.mrb[0].mxu0
        %v669 = vadd.f32 %v561, %v668
        %670 = vmatprep.mubr.f32.mxu0 %v487
        %671 = vmatmul.mubr.f32.gmra.mrb[0].mxu0 %v486
        %v672 = vpop.f32.mrb[0].mxu0
        %v673 = vadd.f32 %v557, %v672
        %v674 = vpop.f32.mrb[0].mxu0
        %v675 = vadd.f32 %v561, %v674
        %676 = vdwg.mxu0
        %v677 = vmax.f32 %v631, 0.0
        %v678 = vmax.f32 %v633, 0.0
        %v679 = vmax.f32 %v637, 0.0
        %v680 = vmax.f32 %v639, 0.0
        %v681 = vmax.f32 %v643, 0.0
        %v682 = vmax.f32 %v645, 0.0
        %v683 = vmax.f32 %v649, 0.0
        %v684 = vmax.f32 %v651, 0.0
        %v685 = vmax.f32 %v655, 0.0
        %v686 = vmax.f32 %v657, 0.0
        %v687 = vmax.f32 %v661, 0.0
        %v688 = vmax.f32 %v663, 0.0
        %v689 = vmax.f32 %v667, 0.0
        %v690 = vmax.f32 %v669, 0.0
        %v691 = vmax.f32 %v673, 0.0
        %v692 = vmax.f32 %v675, 0.0
        %v693 = vld [vmem:[#allocation5] sm:$0xff]
        %v694 = vld [vmem:[#allocation5 + $0x8] sm:$0xff]
        %v695 = vld [vmem:[#allocation5 + $0x10] sm:$0xff]
        %v696 = vld [vmem:[#allocation5 + $0x18] sm:$0xff]
        %v697 = vld [vmem:[#allocation5 + $0x20] sm:$0xff]
        %v698 = vld [vmem:[#allocation5 + $0x28] sm:$0xff]
        %v699 = vld [vmem:[#allocation5 + $0x30] sm:$0xff]
        %v700 = vld [vmem:[#allocation5 + $0x38] sm:$0xff]
        %v701 = vld [vmem:[#allocation5 + $0x40] sm:$0xff]
        %v702 = vld [vmem:[#allocation5 + $0x48] sm:$0xff]
        %v703 = vld [vmem:[#allocation5 + $0x50] sm:$0xff]
        %v704 = vld [vmem:[#allocation5 + $0x58] sm:$0xff]
        %v705 = vld [vmem:[#allocation5 + $0x60] sm:$0xff]
        %v706 = vld [vmem:[#allocation5 + $0x68] sm:$0xff]
        %v707 = vld [vmem:[#allocation5 + $0x70] sm:$0xff]
        %v708 = vld [vmem:[#allocation5 + $0x78] sm:$0xff]
        %v709 = vld [vmem:[#allocation5 + $0x80] sm:$0xff]
        %v710 = vld [vmem:[#allocation5 + $0x88] sm:$0xff]
        %v711 = vld [vmem:[#allocation5 + $0x90] sm:$0xff]
        %v712 = vld [vmem:[#allocation5 + $0x98] sm:$0xff]
        %v713 = vld [vmem:[#allocation5 + $0xa0] sm:$0xff]
        %v714 = vld [vmem:[#allocation5 + $0xa8] sm:$0xff]
        %v715 = vld [vmem:[#allocation5 + $0xb0] sm:$0xff]
        %v716 = vld [vmem:[#allocation5 + $0xb8] sm:$0xff]
        %v717 = vld [vmem:[#allocation5 + $0xc0] sm:$0xff]
        %v718 = vld [vmem:[#allocation5 + $0xc8] sm:$0xff]
        %v719 = vld [vmem:[#allocation5 + $0xd0] sm:$0xff]
        %v720 = vld [vmem:[#allocation5 + $0xd8] sm:$0xff]
        %v721 = vld [vmem:[#allocation5 + $0xe0] sm:$0xff]
        %v722 = vld [vmem:[#allocation5 + $0xe8] sm:$0xff]
        %v723 = vld [vmem:[#allocation5 + $0xf0] sm:$0xff]
        %v724 = vld [vmem:[#allocation5 + $0xf8] sm:$0xff]
        %v725 = vld [vmem:[%s6] sm:$0x1]
        %v727 = vlaneseq
        %v728 = vshrl.u32 %v727, 7
        %v729 = vsub.s32 0, %v728
        %v730 = vrot.slane %v725, %v729
        %732 = vmatprep.subr.mxu0 0.0
        %733 = vmatpush1.msra.mxu0 %v693
        %734 = vmatprep.subr.mxu0 0.0
        %735 = vmatpush1.msra.mxu0 %v694
        %736 = vmatprep.subr.mxu0 0.0
        %737 = vmatpush1.msra.mxu0 %v695
        %738 = vmatprep.subr.mxu0 0.0
        %739 = vmatpush1.msra.mxu0 %v696
        %740 = vmatprep.subr.mxu0 0.0
        %741 = vmatpush1.msra.mxu0 %v697
        %742 = vmatprep.subr.mxu0 0.0
        %743 = vmatpush1.msra.mxu0 %v698
        %744 = vmatprep.subr.mxu0 0.0
        %745 = vmatpush1.msra.mxu0 %v699
        %746 = vmatprep.subr.mxu0 0.0
        %747 = vmatpush1.msra.mxu0 %v700
        %748 = vmatprep.subr.mxu0 0.0
        %749 = vmatpush1.msra.mxu0 %v701
        %750 = vmatprep.subr.mxu0 0.0
        %751 = vmatpush1.msra.mxu0 %v702
        %752 = vmatprep.subr.mxu0 0.0
        %753 = vmatpush1.msra.mxu0 %v703
        %754 = vmatprep.subr.mxu0 0.0
        %755 = vmatpush1.msra.mxu0 %v704
        %756 = vmatprep.subr.mxu0 0.0
        %757 = vmatpush1.msra.mxu0 %v705
        %758 = vmatprep.subr.mxu0 0.0
        %759 = vmatpush1.msra.mxu0 %v706
        %760 = vmatprep.subr.mxu0 0.0
        %761 = vmatpush1.msra.mxu0 %v707
        %762 = vmatprep.subr.mxu0 0.0
        %763 = vmatpush1.msra.mxu0 %v708
        %764 = vmatprep.subr.mxu0 0.0
        %765 = vmatpush1.msra.mxu0 %v709
        %766 = vmatprep.subr.mxu0 0.0
        %767 = vmatpush1.msra.mxu0 %v710
        %768 = vmatprep.subr.mxu0 0.0
        %769 = vmatpush1.msra.mxu0 %v711
        %770 = vmatprep.subr.mxu0 0.0
        %771 = vmatpush1.msra.mxu0 %v712
        %772 = vmatprep.subr.mxu0 0.0
        %773 = vmatpush1.msra.mxu0 %v713
        %774 = vmatprep.subr.mxu0 0.0
        %775 = vmatpush1.msra.mxu0 %v714
        %776 = vmatprep.subr.mxu0 0.0
        %777 = vmatpush1.msra.mxu0 %v715
        %778 = vmatprep.subr.mxu0 0.0
        %779 = vmatpush1.msra.mxu0 %v716
        %780 = vmatprep.subr.mxu0 0.0
        %781 = vmatpush1.msra.mxu0 %v717
        %782 = vmatprep.subr.mxu0 0.0
        %783 = vmatpush1.msra.mxu0 %v718
        %784 = vmatprep.subr.mxu0 0.0
        %785 = vmatpush1.msra.mxu0 %v719
        %786 = vmatprep.subr.mxu0 0.0
        %787 = vmatpush1.msra.mxu0 %v720
        %788 = vmatprep.subr.mxu0 0.0
        %789 = vmatpush1.msra.mxu0 %v721
        %790 = vmatprep.subr.mxu0 0.0
        %791 = vmatpush1.msra.mxu0 %v722
        %792 = vmatprep.subr.mxu0 0.0
        %793 = vmatpush1.msra.mxu0 %v723
        %794 = vmatprep.subr.mxu0 0.0
        %795 = vmatpush1.msra.mxu0 %v724
        %796 = vmatprep.mubr.f32.mxu0 %v678
        %797 = vmatmul.mubr.f32.gmra.mrb[0].mxu0 %v677
        %v798 = vpop.f32.mrb[0].mxu0
        %v799 = vadd.f32 %v730, %v798
        %v800 = vpop.f32.mrb[0].mxu0
        %801 = vmatprep.mubr.f32.mxu0 %v680
        %802 = vmatmul.mubr.f32.gmra.mrb[0].mxu0 %v679
        %v803 = vpop.f32.mrb[0].mxu0
        %v804 = vadd.f32 %v730, %v803
        %v805 = vpop.f32.mrb[0].mxu0
        %806 = vmatprep.mubr.f32.mxu0 %v682
        %807 = vmatmul.mubr.f32.gmra.mrb[0].mxu0 %v681
        %v808 = vpop.f32.mrb[0].mxu0
        %v809 = vadd.f32 %v730, %v808
        %v810 = vpop.f32.mrb[0].mxu0
        %811 = vmatprep.mubr.f32.mxu0 %v684
        %812 = vmatmul.mubr.f32.gmra.mrb[0].mxu0 %v683
        %v813 = vpop.f32.mrb[0].mxu0
        %v814 = vadd.f32 %v730, %v813
        %v815 = vpop.f32.mrb[0].mxu0
        %816 = vmatprep.mubr.f32.mxu0 %v686
        %817 = vmatmul.mubr.f32.gmra.mrb[0].mxu0 %v685
        %v818 = vpop.f32.mrb[0].mxu0
        %v819 = vadd.f32 %v730, %v818
        %v820 = vpop.f32.mrb[0].mxu0
        %821 = vmatprep.mubr.f32.mxu0 %v688
        %822 = vmatmul.mubr.f32.gmra.mrb[0].mxu0 %v687
        %v823 = vpop.f32.mrb[0].mxu0
        %v824 = vadd.f32 %v730, %v823
        %v825 = vpop.f32.mrb[0].mxu0
        %826 = vmatprep.mubr.f32.mxu0 %v690
        %827 = vmatmul.mubr.f32.gmra.mrb[0].mxu0 %v689
        %v828 = vpop.f32.mrb[0].mxu0
        %v829 = vadd.f32 %v730, %v828
        %v830 = vpop.f32.mrb[0].mxu0
        %831 = vmatprep.mubr.f32.mxu0 %v692
        %832 = vmatmul.mubr.f32.gmra.mrb[0].mxu0 %v691
        %v833 = vpop.f32.mrb[0].mxu0
        %v834 = vadd.f32 %v730, %v833
        %v835 = vpop.f32.mrb[0].mxu0
        %836 = vdwg.mxu0
        %v837 = vtanh.pop %v799
        %v838 = vtanh.pop %v804
        %v839 = vtanh.pop %v809
        %v840 = vtanh.pop %v814
        %v841 = vtanh.pop %v819
        %v842 = vtanh.pop %v824
        %v843 = vtanh.pop %v829
        %v844 = vtanh.pop %v834
        %v845 = vmul.f32 %v837, 0.5
        %v846 = vmul.f32 %v838, 0.5
        %v847 = vmul.f32 %v839, 0.5
        %v848 = vmul.f32 %v840, 0.5
        %v849 = vmul.f32 %v841, 0.5
        %v850 = vmul.f32 %v842, 0.5
        %v851 = vmul.f32 %v843, 0.5
        %v852 = vmul.f32 %v844, 0.5
        %v853 = vadd.f32 %v845, 0.5
        %v854 = vadd.f32 %v846, 0.5
        %v855 = vadd.f32 %v847, 0.5
        %v856 = vadd.f32 %v848, 0.5
        %v857 = vadd.f32 %v849, 0.5
        %v858 = vadd.f32 %v850, 0.5
        %v859 = vadd.f32 %v851, 0.5
        %v860 = vadd.f32 %v852, 0.5
        %861 = vst [vmem:[%s302] sm:$0xff] %v853
        %862 = vst [vmem:[%s302 + $0x8] sm:$0xff] %v854
        %863 = vst [vmem:[%s302 + $0x10] sm:$0xff] %v855
        %864 = vst [vmem:[%s302 + $0x18] sm:$0xff] %v856
        %865 = vst [vmem:[%s302 + $0x20] sm:$0xff] %v857
        %866 = vst [vmem:[%s302 + $0x28] sm:$0xff] %v858
        %867 = vst [vmem:[%s302 + $0x30] sm:$0xff] %v859
        %868 = vst [vmem:[%s302 + $0x38] sm:$0xff] %v860
        %s869 = sand.u32 %s183, 1
        %s870 = scalar_lea.sflag [#allocation4], %s869
        %s871 = sand.u32 %s183, 1
        %s872 = smul.addr %s871, 64
        %s873 = scalar_lea.vmem [#allocation7], %s872
        // Predicated region
        $region57: #{tpu_custom_call.1} parent=47 // pred_check
          %p874 = pneg %p193
        $region58: #{tpu_custom_call.1} parent=47 // pred_check_branch
          %876 = sbr.rel (%p874) target = $region60
        $region59: #{tpu_custom_call.1} parent=47 // pred_region
          %s877 = smul.u32 8, %s23
          %s879 = ssub.s32 1024, 1024
          %880 = vsyncadd %s870, %s879
          %s881 = smul.addr %s877, 128
          %s882 = scalar_lea.hbm %s7, %s881
          %s883 = sshll.u32 %s873, 4
          %s884 = int_to_ptr.vmem [resolvable:$true] %s883
          %889 = dma.vmem_to_hbm [thread:$0]  %s884, 1024, %s882, %s870, 128, 128, 8
        $region60: #{tpu_custom_call.1} parent=47 // pred_fallthru
          _
      $region48: #{tpu_custom_call.1} parent=5 // pred_fallthru
        _
      %p890 = scmp.le.s32.totalorder 2, %s18
      // Predicated region
      $region61: #{tpu_custom_call.1} parent=5 // pred_check
        %p891 = pneg %p890
      $region62: #{tpu_custom_call.1} parent=5 // pred_check_branch
        %893 = sbr.rel (%p891) target = $region64
      $region63: #{tpu_custom_call.1} parent=5 // pred_region
        %s894 = ssub.s32 %s18, 2
        // Predicated region
        $region65: #{tpu_custom_call.1} parent=63 // pred_check
          %p895 = pneg %p199
        $region66: #{tpu_custom_call.1} parent=63 // pred_check_branch
          %897 = sbr.rel (%p895) target = $region68
        $region67: #{tpu_custom_call.1} parent=63 // pred_region
          %s898 = sand.u32 %s184, 1
          %s899 = scalar_lea.sflag [#allocation4], %s898
          %s900 = sand.u32 %s184, 1
          %s901 = smul.addr %s900, 64
          %s902 = scalar_lea.vmem [#allocation7], %s901
          %903 = dma.done %s899, 1024
        $region68: #{tpu_custom_call.1} parent=63 // pred_fallthru
          _
      $region64: #{tpu_custom_call.1} parent=5 // pred_fallthru
        _
    $region6: #{tpu_custom_call.1} parent=1 // loop_footer
      %s22 = sadd.s32 1, %s18
    $region7: #{tpu_custom_call.1} parent=1 // loop_footer_branch
      %17 = sbr.rel target = $region3
    $region8: #{tpu_custom_call.1} parent=1 // loop_exit
      _
    %904 = vsyncpa [#allocation3], 1
    %s905 = scalar_lea.sflag [#allocation3], 1
    %906 = vsyncpa %s905, 1
    %907 = vsyncpa [#allocation6], 1
    %908 = vsyncpa [#allocation4], 1
    %s909 = scalar_lea.sflag [#allocation4], 1
    %910 = vsyncpa %s909, 1

</llo_original>
